<compile_context>
chip_gen: v7x
topology: tpu7x:2x2x1
jax: 0.10.0
libtpu: 0.0.40
codegen_flags: <defaults>
</compile_context>

<pallas_src>
import functools

import jax
import jax.numpy as jnp
from jax.experimental import pallas as pl
from jax.experimental.pallas import tpu as pltpu


_LANE = 128
_MAX_TILE = 8192          # point-tile size (lane axis); sweepable 2048-16384


def _round_up(x, m):
    return ((x + m - 1) // m) * m


# ---------------------------------------------------------------------------
# Hot-path kernel (lane-dense: points on lanes).
#   wmat : (width, d)   W[w, i]                       (small VMEM, replicated)
#   bcol : (width, 1)   B[w]
#   ueff : (width, d)   U[w, j] * sigmoid(G[w, j]) / width
#   z    : (d, TN)      transposed point tile
#   out  : (d, TN)      out[j, n] = sum_w ueff[w, j] * tanh(sum_i W[w,i] z[i,n] + B[w])
# ---------------------------------------------------------------------------
def _point_eval_kernel(wmat_ref, bcol_ref, ueff_ref, z_ref, o_ref):
    d = z_ref.shape[0]
    z = z_ref[...]                                   # (d, TN)
    wmat = wmat_ref[...]                             # (width, d)
    ueff = ueff_ref[...]                             # (width, d), 1/width folded in

    # s[w, :] = sum_i W[w, i] * z[i, :] + B[w]   -- exact-f32 VPU outer-product MACs
    s = wmat[:, 0:1] * z[0:1, :] + bcol_ref[...]     # (width, TN)
    for i in range(1, d):
        s = s + wmat[:, i:i + 1] * z[i:i + 1, :]
    h = jnp.tanh(s)                                  # (width, TN): fully dense vregs

    # out[j, :] = sum_w ueff[w, j] * h[w, :]
    cols = [jnp.sum(ueff[:, j:j + 1] * h, axis=0, keepdims=True) for j in range(d)]
    o_ref[...] = jnp.concatenate(cols, axis=0)       # (d, TN), single lane-dense store


@functools.partial(jax.jit, static_argnames=("width",))
def _hyper_forward(w1, b1, w2, b2, w3, b3, t, z, *, width):
    n, d = z.shape
    bs = width * d

    # ---- t-only stage: hyper-MLP -> W / B / Ueff, computed ONCE per call ----
    t2 = jnp.asarray(t, jnp.float32).reshape(1, 1)
    h1 = jnp.tanh(t2 @ w1 + b1)
    h2 = jnp.tanh(h1 @ w2 + b2)
    p = (h2 @ w3 + b3).reshape(-1)                   # (3*bs + width,)
    w_mat = p[:bs].reshape(width, d)                 # W[w, i]
    u = p[bs:2 * bs].reshape(width, d)
    g = p[2 * bs:3 * bs].reshape(width, d)
    b_col = p[3 * bs:].reshape(width, 1)
    u_eff = (u * jax.nn.sigmoid(g)) * (1.0 / width)  # mean over width folded in

    # ---- lane-dense point evaluation (points on the 128-lane axis) ----------
    tn = min(_MAX_TILE, _round_up(max(n, _LANE), _LANE))
    num_tiles = pl.cdiv(n, tn)
    npad = num_tiles * tn
    z_t = jnp.zeros((d, npad), jnp.float32).at[:, :n].set(z.T.astype(jnp.float32))

    out_t = pl.pallas_call(
        _point_eval_kernel,
        out_shape=jax.ShapeDtypeStruct((d, npad), jnp.float32),
        grid=(num_tiles,),
        in_specs=[
            pl.BlockSpec((width, d), lambda i: (0, 0)),   # W         (replicated)
            pl.BlockSpec((width, 1), lambda i: (0, 0)),   # B         (replicated)
            pl.BlockSpec((width, d), lambda i: (0, 0)),   # Ueff/width(replicated)
            pl.BlockSpec((d, tn), lambda i: (0, i)),      # z tile (lane-dense)
        ],
        out_specs=pl.BlockSpec((d, tn), lambda i: (0, i)),
        compiler_params=pltpu.CompilerParams(
            dimension_semantics=("parallel",),            # megacore on v7x
            vmem_limit_bytes=32 * 1024 * 1024,
        ),
    )(w_mat, b_col, u_eff, z_t)

    return out_t[:, :n].T                                 # (N, d)


def _linear_params(key, fan_in, fan_out):
    """PyTorch-style nn.Linear init: U(-1/sqrt(fan_in), 1/sqrt(fan_in))."""
    kw, kb = jax.random.split(key)
    bound = 1.0 / (fan_in ** 0.5)
    w = jax.random.uniform(kw, (fan_in, fan_out), jnp.float32, -bound, bound)
    b = jax.random.uniform(kb, (1, fan_out), jnp.float32, -bound, bound)
    return w, b


class HyperNetworkPallas:
    def __init__(self, in_out_dim, hidden_dim, width, key):
        self.in_out_dim = in_out_dim
        self.hidden_dim = hidden_dim
        self.width = width
        self.blocksize = width * in_out_dim
        self.out_dim = 3 * self.blocksize + width
        k1, k2, k3 = jax.random.split(key, 3)
        self.w1, self.b1 = _linear_params(k1, 1, hidden_dim)
        self.w2, self.b2 = _linear_params(k2, hidden_dim, hidden_dim)
        self.w3, self.b3 = _linear_params(k3, hidden_dim, self.out_dim)

    def __call__(self, t, z):
        assert z.shape[1] == self.in_out_dim
        return _hyper_forward(self.w1, self.b1, self.w2, self.b2,
                              self.w3, self.b3, t, z, width=self.width)


# --------------------------- pure-JAX reference ------------------------------
def reference_forward(net, t, z):
    """Mirrors the PyTorch module exactly."""
    t2 = jnp.asarray(t, jnp.float32).reshape(1, 1)
    h1 = jnp.tanh(t2 @ net.w1 + net.b1)
    h2 = jnp.tanh(h1 @ net.w2 + net.b2)
    p = (h2 @ net.w3 + net.b3).reshape(-1)
    bs, w, d = net.blocksize, net.width, net.in_out_dim
    W = p[:bs].reshape(w, d, 1)
    U = p[bs:2 * bs].reshape(w, 1, d)
    G = p[2 * bs:3 * bs].reshape(w, 1, d)
    B = p[3 * bs:].reshape(w, 1, 1)
    U = U * jax.nn.sigmoid(G)
    Z = jnp.broadcast_to(z[None], (w,) + z.shape)
    h = jnp.tanh(Z @ W + B)                # (width, N, 1)
    return (h @ U).mean(0)                 # (N, d)


if __name__ == "__main__":
    key = jax.random.PRNGKey(0)
    k_net, k_z, k_t = jax.random.split(key, 3)

    in_out_dim, hidden_dim, width, n_points = 4, 32, 8, 16
    net = HyperNetworkPallas(in_out_dim, hidden_dim, width, k_net)

    z = jax.random.normal(k_z, (n_points, in_out_dim), jnp.float32)
    t = jax.random.uniform(k_t, (), jnp.float32)

    out = jax.block_until_ready(net(t, z))
    ref = reference_forward(net, t, z)
    assert out.shape == (n_points, in_out_dim)
    assert out.dtype == jnp.float32
    assert jnp.allclose(out, ref, rtol=1e-4, atol=1e-4), "mismatch vs reference (small)"

    # Exercise the tail-padded single-tile path and the multi-tile grid path.
    for n_big in (1000, 9000):
        z_big = jax.random.normal(jax.random.PRNGKey(n_big),
                                  (n_big, in_out_dim), jnp.float32)
        out_big = jax.block_until_ready(net(t, z_big))
        ref_big = reference_forward(net, t, z_big)
        assert jnp.allclose(out_big, ref_big, rtol=1e-4, atol=1e-4), \
            f"mismatch vs reference (N={n_big})"

    print("KERNEL_OK")
</pallas_src>

<mosaic_0001>
module attributes {stable_mosaic.version = 11 : i64} {
  func.func @_point_eval_kernel(%arg0: i32, %arg1: memref<8x4xf32, #tpu.memory_space<vmem>>, %arg2: memref<8x1xf32, #tpu.memory_space<vmem>>, %arg3: memref<8x4xf32, #tpu.memory_space<vmem>>, %arg4: memref<4x128xf32, #tpu.memory_space<vmem>>, %arg5: memref<4x128xf32, #tpu.memory_space<vmem>>) attributes {dimension_semantics = [#tpu.dimension_semantics<parallel>], iteration_bounds = array<i64: 1>, scalar_prefetch = 0 : i64, scratch_operands = 0 : i64, tpu.core_type = #tpu.core_type<tc>, window_params = [{pipeline_mode = #tpu.pipeline_mode<synchronous>, transform_indices = @transform_0, window_bounds = array<i64: 8, 4>}, {pipeline_mode = #tpu.pipeline_mode<synchronous>, transform_indices = @transform_1, window_bounds = array<i64: 8, 1>}, {pipeline_mode = #tpu.pipeline_mode<synchronous>, transform_indices = @transform_2, window_bounds = array<i64: 8, 4>}, {transform_indices = @transform_3, window_bounds = array<i64: 4, 128>}, {transform_indices = @transform_4, window_bounds = array<i64: 4, 128>}]} {
    %c0 = arith.constant 0 : index
    %c0_0 = arith.constant 0 : index
    %0 = vector.load %arg4[%c0, %c0_0] : memref<4x128xf32, #tpu.memory_space<vmem>>, vector<4x128xf32>
    %c0_1 = arith.constant 0 : index
    %c0_2 = arith.constant 0 : index
    %1 = vector.load %arg1[%c0_1, %c0_2] : memref<8x4xf32, #tpu.memory_space<vmem>>, vector<8x4xf32>
    %c0_3 = arith.constant 0 : index
    %c0_4 = arith.constant 0 : index
    %2 = vector.load %arg3[%c0_3, %c0_4] : memref<8x4xf32, #tpu.memory_space<vmem>>, vector<8x4xf32>
    %3 = vector.extract_strided_slice %1 {offsets = [0, 0], sizes = [8, 1], strides = [1, 1]} : vector<8x4xf32> to vector<8x1xf32>
    %4 = vector.extract_strided_slice %0 {offsets = [0, 0], sizes = [1, 128], strides = [1, 1]} : vector<4x128xf32> to vector<1x128xf32>
    %5 = vector.broadcast %3 : vector<8x1xf32> to vector<8x128xf32>
    %6 = vector.broadcast %4 : vector<1x128xf32> to vector<8x128xf32>
    %7 = arith.mulf %5, %6 : vector<8x128xf32>
    %c0_5 = arith.constant 0 : index
    %c0_6 = arith.constant 0 : index
    %8 = vector.load %arg2[%c0_5, %c0_6] : memref<8x1xf32, #tpu.memory_space<vmem>>, vector<8x1xf32>
    %9 = vector.broadcast %8 : vector<8x1xf32> to vector<8x128xf32>
    %10 = arith.addf %7, %9 : vector<8x128xf32>
    %11 = vector.extract_strided_slice %1 {offsets = [0, 1], sizes = [8, 1], strides = [1, 1]} : vector<8x4xf32> to vector<8x1xf32>
    %12 = vector.extract_strided_slice %0 {offsets = [1, 0], sizes = [1, 128], strides = [1, 1]} : vector<4x128xf32> to vector<1x128xf32>
    %13 = vector.broadcast %11 : vector<8x1xf32> to vector<8x128xf32>
    %14 = vector.broadcast %12 : vector<1x128xf32> to vector<8x128xf32>
    %15 = arith.mulf %13, %14 : vector<8x128xf32>
    %16 = arith.addf %10, %15 : vector<8x128xf32>
    %17 = vector.extract_strided_slice %1 {offsets = [0, 2], sizes = [8, 1], strides = [1, 1]} : vector<8x4xf32> to vector<8x1xf32>
    %18 = vector.extract_strided_slice %0 {offsets = [2, 0], sizes = [1, 128], strides = [1, 1]} : vector<4x128xf32> to vector<1x128xf32>
    %19 = vector.broadcast %17 : vector<8x1xf32> to vector<8x128xf32>
    %20 = vector.broadcast %18 : vector<1x128xf32> to vector<8x128xf32>
    %21 = arith.mulf %19, %20 : vector<8x128xf32>
    %22 = arith.addf %16, %21 : vector<8x128xf32>
    %23 = vector.extract_strided_slice %1 {offsets = [0, 3], sizes = [8, 1], strides = [1, 1]} : vector<8x4xf32> to vector<8x1xf32>
    %24 = vector.extract_strided_slice %0 {offsets = [3, 0], sizes = [1, 128], strides = [1, 1]} : vector<4x128xf32> to vector<1x128xf32>
    %25 = vector.broadcast %23 : vector<8x1xf32> to vector<8x128xf32>
    %26 = vector.broadcast %24 : vector<1x128xf32> to vector<8x128xf32>
    %27 = arith.mulf %25, %26 : vector<8x128xf32>
    %28 = arith.addf %22, %27 : vector<8x128xf32>
    %29 = math.tanh %28 : vector<8x128xf32>
    %30 = vector.extract_strided_slice %2 {offsets = [0, 0], sizes = [8, 1], strides = [1, 1]} : vector<8x4xf32> to vector<8x1xf32>
    %31 = vector.broadcast %30 : vector<8x1xf32> to vector<8x128xf32>
    %32 = arith.mulf %31, %29 : vector<8x128xf32>
    %cst = arith.constant dense<0.000000e+00> : vector<128xf32>
    %33 = vector.multi_reduction <add>, %32, %cst [0] : vector<8x128xf32> to vector<128xf32>
    %34 = vector.shape_cast %33 : vector<128xf32> to vector<1x128xf32>
    %35 = vector.extract_strided_slice %2 {offsets = [0, 1], sizes = [8, 1], strides = [1, 1]} : vector<8x4xf32> to vector<8x1xf32>
    %36 = vector.broadcast %35 : vector<8x1xf32> to vector<8x128xf32>
    %37 = arith.mulf %36, %29 : vector<8x128xf32>
    %cst_7 = arith.constant dense<0.000000e+00> : vector<128xf32>
    %38 = vector.multi_reduction <add>, %37, %cst_7 [0] : vector<8x128xf32> to vector<128xf32>
    %39 = vector.shape_cast %38 : vector<128xf32> to vector<1x128xf32>
    %40 = vector.extract_strided_slice %2 {offsets = [0, 2], sizes = [8, 1], strides = [1, 1]} : vector<8x4xf32> to vector<8x1xf32>
    %41 = vector.broadcast %40 : vector<8x1xf32> to vector<8x128xf32>
    %42 = arith.mulf %41, %29 : vector<8x128xf32>
    %cst_8 = arith.constant dense<0.000000e+00> : vector<128xf32>
    %43 = vector.multi_reduction <add>, %42, %cst_8 [0] : vector<8x128xf32> to vector<128xf32>
    %44 = vector.shape_cast %43 : vector<128xf32> to vector<1x128xf32>
    %45 = vector.extract_strided_slice %2 {offsets = [0, 3], sizes = [8, 1], strides = [1, 1]} : vector<8x4xf32> to vector<8x1xf32>
    %46 = vector.broadcast %45 : vector<8x1xf32> to vector<8x128xf32>
    %47 = arith.mulf %46, %29 : vector<8x128xf32>
    %cst_9 = arith.constant dense<0.000000e+00> : vector<128xf32>
    %48 = vector.multi_reduction <add>, %47, %cst_9 [0] : vector<8x128xf32> to vector<128xf32>
    %49 = vector.shape_cast %48 : vector<128xf32> to vector<1x128xf32>
    %50 = tpu.concatenate %34, %39, %44, %49 in 0 : vector<1x128xf32>, vector<1x128xf32>, vector<1x128xf32>, vector<1x128xf32> -> vector<4x128xf32>
    %c0_10 = arith.constant 0 : index
    %c0_11 = arith.constant 0 : index
    %51 = vector.load %arg5[%c0_10, %c0_11] : memref<4x128xf32, #tpu.memory_space<vmem>>, vector<4x128xf32>
    tpu.vector_store %arg5[%c0_10, %c0_11], %50 {strides = array<i32>} : memref<4x128xf32, #tpu.memory_space<vmem>>, vector<4x128xf32>,
    return
  }
  func.func @transform_0(%arg0: i32) -> (i32, i32) {
    %c0_i32 = arith.constant 0 : i32
    %c0_i32_0 = arith.constant 0 : i32
    %c0_i32_1 = arith.constant 0 : i32
    return %c0_i32, %c0_i32_0 : i32, i32
  }
  func.func @transform_1(%arg0: i32) -> (i32, i32) {
    %c0_i32 = arith.constant 0 : i32
    %c0_i32_0 = arith.constant 0 : i32
    %c0_i32_1 = arith.constant 0 : i32
    return %c0_i32, %c0_i32_0 : i32, i32
  }
  func.func @transform_2(%arg0: i32) -> (i32, i32) {
    %c0_i32 = arith.constant 0 : i32
    %c0_i32_0 = arith.constant 0 : i32
    %c0_i32_1 = arith.constant 0 : i32
    return %c0_i32, %c0_i32_0 : i32, i32
  }
  func.func @transform_3(%arg0: i32) -> (i32, i32) {
    %c0_i32 = arith.constant 0 : i32
    %c0_i32_0 = arith.constant 0 : i32
    return %c0_i32, %arg0 : i32, i32
  }
  func.func @transform_4(%arg0: i32) -> (i32, i32) {
    %c0_i32 = arith.constant 0 : i32
    %c0_i32_0 = arith.constant 0 : i32
    return %c0_i32, %arg0 : i32, i32
  }
}

</mosaic_0001>

<llo_original>
// kernel: _hyper_forward.1
$region0: #{_hyper_forward.1}
  #allocation0 [shape = 'u32[]', space=smem, size = 0x4, offset = 0x4, fixed_abs, tag = 'smem constant byte address 0x4 - core index']
  #allocation1 [shape = 'u32[144,128]{1,0:T(1,128)}', space=vmem, size = 0x12000, scoped, tag = 'internal scratch']
  %s0 = inlined_call_operand.vmem [shape: f32[8,4], index: 0, kind: input, shape index: {}]
  %s1 = inlined_call_operand.vmem [shape: f32[8,1], index: 1, kind: input, shape index: {}]
  %s2 = inlined_call_operand.vmem [shape: f32[8,4], index: 2, kind: input, shape index: {}]
  %s3 = inlined_call_operand.vmem [shape: f32[4,128], index: 3, kind: input, shape index: {}]
  %s4 = inlined_call_operand.vmem [shape: f32[4,128], index: 4, kind: output, shape index: {}]
  %s5 = sld [smem:[#allocation0]]
  $region26: #{_hyper_forward.1} parent=0
    _
  %s7 = ssub.s32 1, %s5
  %s8 = scalar_select 0, %s7, %s5
  // Predicated region
  $region2: #{_hyper_forward.1} parent=0 // pred_check
    _
  $region3: #{_hyper_forward.1} parent=0 // pred_check_branch
    %10 = sbr.rel (0) target = $region5
  $region4: #{_hyper_forward.1} parent=0 // pred_region
    _
  $region5: #{_hyper_forward.1} parent=0 // pred_fallthru
    _
  // Predicated region
  $region6: #{_hyper_forward.1} parent=0 // pred_check
    _
  $region7: #{_hyper_forward.1} parent=0 // pred_check_branch
    %12 = sbr.rel (0) target = $region9
  $region8: #{_hyper_forward.1} parent=0 // pred_region
    _
  $region9: #{_hyper_forward.1} parent=0 // pred_fallthru
    _
  // Predicated region
  $region10: #{_hyper_forward.1} parent=0 // pred_check
    _
  $region11: #{_hyper_forward.1} parent=0 // pred_check_branch
    %14 = sbr.rel (0) target = $region13
  $region12: #{_hyper_forward.1} parent=0 // pred_region
    _
  $region13: #{_hyper_forward.1} parent=0 // pred_fallthru
    _
  // Predicated region
  $region14: #{_hyper_forward.1} parent=0 // pred_check
    _
  $region15: #{_hyper_forward.1} parent=0 // pred_check_branch
    %16 = sbr.rel (0) target = $region17
  $region16: #{_hyper_forward.1} parent=0 // pred_region
    _
  $region17: #{_hyper_forward.1} parent=0 // pred_fallthru
    _
  %v17 = vld [vmem:[%s3] sm:$0xf]
  %v18 = vld [vmem:[%s0] sm:$0xff]
  %v19 = vld [vmem:[%s2] sm:$0xff]
  %21 = vset.pattern.permute.xlu0 0
  %22 = vperm.xlu0 %21, %v18
  %v23 = vpop.permute.xlu0 %22
  %v25 = vlaneseq
  %v26 = vshrl.u32 %v25, 7
  %v27 = vsub.s32 0, %v26
  %v28 = vrot.slane %v17, %v27
  %v29 = vmul.f32 %v23, %v28
  %v30 = vld [vmem:[%s1] sm:$0xff]
  %32 = vset.pattern.permute.xlu0 0
  %33 = vperm.xlu0 %32, %v30
  %v34 = vpop.permute.xlu0 %33
  %v36 = vadd.f32 %v29, %v34
  %37 = vset.pattern.permute.xlu0 1
  %38 = vperm.xlu0 %37, %v18
  %v39 = vpop.permute.xlu0 %38
  %v41 = vlaneseq
  %v42 = vshrl.u32 %v41, 7
  %v43 = vsub.s32 1, %v42
  %v44 = vrot.slane %v17, %v43
  %v45 = vmul.f32 %v39, %v44
  %v46 = vadd.f32 %v36, %v45
  %47 = vset.pattern.permute.xlu0 2
  %48 = vperm.xlu0 %47, %v18
  %v49 = vpop.permute.xlu0 %48
  %v51 = vlaneseq
  %v52 = vshrl.u32 %v51, 7
  %v53 = vsub.s32 2, %v52
  %v54 = vrot.slane %v17, %v53
  %v55 = vmul.f32 %v49, %v54
  %v56 = vadd.f32 %v46, %v55
  %57 = vset.pattern.permute.xlu0 3
  %58 = vperm.xlu0 %57, %v18
  %v59 = vpop.permute.xlu0 %58
  %v61 = vlaneseq
  %v62 = vshrl.u32 %v61, 7
  %v63 = vsub.s32 3, %v62
  %v64 = vrot.slane %v17, %v63
  %v65 = vmul.f32 %v59, %v64
  %v66 = vadd.f32 %v56, %v65
  %v67 = vtanh.pop %v66
  %69 = vset.pattern.permute.xlu0 0
  %70 = vperm.xlu0 %69, %v19
  %v71 = vpop.permute.xlu0 %70
  %v73 = vmul.f32 %v71, %v67
  %v74 = vrot.slane %v73, 4
  %v75 = vadd.f32 %v73, %v74
  %v76 = vrot.slane %v75, 2
  %v77 = vadd.f32 %v75, %v76
  %v78 = vrot.slane %v77, 1
  %v79 = vadd.f32 %v77, %v78
  %80 = vset.pattern.permute.xlu0 1
  %81 = vperm.xlu0 %80, %v19
  %v82 = vpop.permute.xlu0 %81
  %v84 = vmul.f32 %v82, %v67
  %v85 = vrot.slane %v84, 4
  %v86 = vadd.f32 %v84, %v85
  %v87 = vrot.slane %v86, 2
  %v88 = vadd.f32 %v86, %v87
  %v89 = vrot.slane %v88, 1
  %v90 = vadd.f32 %v88, %v89
  %91 = vset.pattern.permute.xlu0 2
  %92 = vperm.xlu0 %91, %v19
  %v93 = vpop.permute.xlu0 %92
  %v95 = vmul.f32 %v93, %v67
  %v96 = vrot.slane %v95, 4
  %v97 = vadd.f32 %v95, %v96
  %v98 = vrot.slane %v97, 2
  %v99 = vadd.f32 %v97, %v98
  %v100 = vrot.slane %v99, 1
  %v101 = vadd.f32 %v99, %v100
  %102 = vset.pattern.permute.xlu0 3
  %103 = vperm.xlu0 %102, %v19
  %v104 = vpop.permute.xlu0 %103
  %v106 = vmul.f32 %v104, %v67
  %v107 = vrot.slane %v106, 4
  %v108 = vadd.f32 %v106, %v107
  %v109 = vrot.slane %v108, 2
  %v110 = vadd.f32 %v108, %v109
  %v111 = vrot.slane %v110, 1
  %v112 = vadd.f32 %v110, %v111
  %vm113 = vcmask 1040384
  %v114 = vsel %vm113, %v79, %v90
  %vm115 = vcmask 1041408
  %v116 = vsel %vm115, %v114, %v101
  %vm117 = vcmask 1042432
  %v118 = vsel %vm117, %v116, %v112
  %119 = vst [vmem:[%s4] sm:$0xf] %v118
  // Predicated region
  $region18: #{_hyper_forward.1} parent=0 // pred_check
    _
  $region19: #{_hyper_forward.1} parent=0 // pred_check_branch
    %121 = sbr.rel (0) target = $region21
  $region20: #{_hyper_forward.1} parent=0 // pred_region
    _
  $region21: #{_hyper_forward.1} parent=0 // pred_fallthru
    _
  // Predicated region
  $region22: #{_hyper_forward.1} parent=0 // pred_check
    _
  $region23: #{_hyper_forward.1} parent=0 // pred_check_branch
    %123 = sbr.rel (0) target = $region25
  $region24: #{_hyper_forward.1} parent=0 // pred_region
    _
  $region25: #{_hyper_forward.1} parent=0 // pred_fallthru
    _

</llo_original>
